<compile_context>
chip_gen: v7x
topology: tpu7x:2x2x1
jax: 0.10.0
libtpu: 0.0.40
codegen_flags: <defaults>
</compile_context>

<pallas_src>
import jax
import jax.numpy as jnp
from jax.experimental import pallas as pl
from jax.experimental.pallas import tpu as pltpu


OBS_DIM = 6
ACT_DIM = 2
HL = [256, 512, 256]
OUT_DIM = 2 * ACT_DIM
BATCH_TILE = 1024  # rows per grid step at large batch (multiple of 256)


def vpg_kernel(x_ref,
               w1_ref, b1_ref,
               w2_ref, b2_ref,
               w3_ref, b3_ref,
               w4_ref, b4_ref,
               out_ref):
    x = x_ref[...]                                  # (tile, OBS_DIM) f32
    tile = x.shape[0]

    # ---- Layer 1: Linear(OBS_DIM, HL[0]) + ReLU --------------------------
    # K=6 wastes the MXU contraction depth -> 6 VPU broadcast multiply-adds.
    # (MXU binds overall, so this VALU/XLU work rides in otherwise-idle slots.)
    w1 = w1_ref[...].astype(jnp.float32)            # (OBS_DIM, HL[0])
    h = jnp.broadcast_to(b1_ref[...].astype(jnp.float32), (tile, w1.shape[1]))
    for k in range(OBS_DIM):
        h = h + x[:, k:k + 1] * w1[k:k + 1, :]
    h = jnp.maximum(h, 0.0)

    # ---- Layer 2: Linear(HL[0], HL[1]) + ReLU (bf16 MXU, f32 accumulate) --
    h = jnp.dot(h.astype(jnp.bfloat16), w2_ref[...],
                preferred_element_type=jnp.float32)
    h = jnp.maximum(h + b2_ref[...].astype(jnp.float32), 0.0)

    # ---- Layer 3: Linear(HL[1], HL[2]) + ReLU -----------------------------
    h = jnp.dot(h.astype(jnp.bfloat16), w3_ref[...],
                preferred_element_type=jnp.float32)
    h = jnp.maximum(h + b3_ref[...].astype(jnp.float32), 0.0)

    # ---- Output layer: Linear(HL[2], 2*ACT_DIM) ----------------------------
    out = jnp.dot(h.astype(jnp.bfloat16), w4_ref[...],
                  preferred_element_type=jnp.float32)
    out = out + b4_ref[...].astype(jnp.float32)

    # Fused output: lanes < ACT_DIM keep raw mean, lanes >= ACT_DIM get
    # softplus(x) + 0.05 (F.softplus with beta=1, threshold=20).
    sp = jnp.where(out > 20.0, out,
                   jnp.log1p(jnp.exp(jnp.minimum(out, 20.0)))) + 0.05
    lane = jax.lax.broadcasted_iota(jnp.int32, out.shape, 1)
    out_ref[...] = jnp.where(lane >= ACT_DIM, sp, out)


def _choose_tile(batch, batch_tile=BATCH_TILE):
    """Batch-tile selection.

    * multiple of 8 (sublane granularity);
    * small batches (<=256 rows) run as a single step (latency path);
    * large batches use tiles up to `batch_tile` but always leave >= 2 grid
      steps so the parallel axis can shard across v7x's 2 TensorCores.
    """
    batch8 = -(-batch // 8) * 8
    if batch8 <= 256:
        return batch8
    half = (batch8 // 2) // 256 * 256   # largest 256-multiple giving >= 2 steps
    return max(256, min(batch_tile, half))


def vpg_forward(x, params, batch_tile=BATCH_TILE):
    """x: (batch, OBS_DIM) or (OBS_DIM,).  Returns (mean, std) each (batch, ACT_DIM)."""
    if x.ndim == 1:
        x = x[None, :]
    x = x.astype(jnp.float32)
    batch = x.shape[0]

    tile = _choose_tile(batch, batch_tile)
    padded = -(-batch // tile) * tile
    if padded != batch:
        x = jnp.pad(x, ((0, padded - batch), (0, 0)))

    (w1, b1), (w2, b2), (w3, b3), (w4, b4) = params

    def resident(arr):
        # Constant block index => same block every grid step: the weight/bias
        # stays in VMEM and is not re-DMA'd across steps.
        return pl.BlockSpec(arr.shape, lambda i: (0, 0))

    fused = pl.pallas_call(
        vpg_kernel,
        out_shape=jax.ShapeDtypeStruct((padded, OUT_DIM), jnp.float32),
        grid=(padded // tile,),
        in_specs=[
            pl.BlockSpec((tile, OBS_DIM), lambda i: (i, 0)),
            resident(w1), resident(b1),
            resident(w2), resident(b2),
            resident(w3), resident(b3),
            resident(w4), resident(b4),
        ],
        out_specs=pl.BlockSpec((tile, OUT_DIM), lambda i: (i, 0)),
        compiler_params=pltpu.CompilerParams(
            dimension_semantics=("parallel",),
            vmem_limit_bytes=32 * 1024 * 1024,
        ),
    )(x, w1, b1, w2, b2, w3, b3, w4, b4)

    fused = fused[:batch]
    return fused[:, :ACT_DIM], fused[:, ACT_DIM:]


def init_params(key):
    """Deterministic init; weights (in, out) and biases (1, out), stored bf16."""
    dims = [OBS_DIM] + HL + [OUT_DIM]
    params = []
    for i in range(len(dims) - 1):
        fan_in, fan_out = dims[i], dims[i + 1]
        key, kw, kb = jax.random.split(key, 3)
        bound = 1.0 / jnp.sqrt(fan_in)
        w = jax.random.uniform(kw, (fan_in, fan_out), jnp.float32, -bound, bound)
        b = jax.random.uniform(kb, (1, fan_out), jnp.float32, -bound, bound)
        params.append((w.astype(jnp.bfloat16), b.astype(jnp.bfloat16)))
    return params


def vpg_ref(x, params):
    """Pure-JAX reference mirroring the kernel's bf16-weight / f32-accumulate math."""
    if x.ndim == 1:
        x = x[None, :]
    x = x.astype(jnp.float32)
    (w1, b1), (w2, b2), (w3, b3), (w4, b4) = params

    h = x @ w1.astype(jnp.float32) + b1.astype(jnp.float32)
    h = jnp.maximum(h, 0.0)
    for w, b in ((w2, b2), (w3, b3)):
        h = jnp.dot(h.astype(jnp.bfloat16), w, preferred_element_type=jnp.float32)
        h = jnp.maximum(h + b.astype(jnp.float32), 0.0)
    out = jnp.dot(h.astype(jnp.bfloat16), w4, preferred_element_type=jnp.float32)
    out = out + b4.astype(jnp.float32)

    mean = out[:, :ACT_DIM]
    s = out[:, ACT_DIM:]
    std = jnp.where(s > 20.0, s, jnp.log1p(jnp.exp(jnp.minimum(s, 20.0)))) + 0.05
    return mean, std


if __name__ == "__main__":
    key = jax.random.PRNGKey(0)
    key, kx = jax.random.split(key)
    params = init_params(key)

    # --- Small latency-path check (single grid step, tile=8) ----------------
    batch = 8
    x = jax.random.normal(kx, (batch, OBS_DIM), jnp.float32)
    mean, std = vpg_forward(x, params)
    jax.block_until_ready((mean, std))

    mean_r, std_r = vpg_ref(x, params)
    assert mean.shape == (batch, ACT_DIM) and std.shape == (batch, ACT_DIM)
    assert jnp.allclose(mean, mean_r, atol=5e-3, rtol=5e-3)
    assert jnp.allclose(std, std_r, atol=5e-3, rtol=5e-3)
    assert bool(jnp.all(std > 0.05 - 1e-6))

    # --- Multi-step grid path (tile=256, grid=3; exercises padding + the
    #     >=2-step parallel batch axis used for v7x megacore sharding) --------
    key, kx2 = jax.random.split(key)
    batch2 = 600
    x2 = jax.random.normal(kx2, (batch2, OBS_DIM), jnp.float32)
    mean2, std2 = vpg_forward(x2, params)
    jax.block_until_ready((mean2, std2))

    mean2_r, std2_r = vpg_ref(x2, params)
    assert mean2.shape == (batch2, ACT_DIM) and std2.shape == (batch2, ACT_DIM)
    assert jnp.allclose(mean2, mean2_r, atol=5e-3, rtol=5e-3)
    assert jnp.allclose(std2, std2_r, atol=5e-3, rtol=5e-3)
    assert bool(jnp.all(std2 > 0.05 - 1e-6))

    print("KERNEL_OK")
</pallas_src>

<mosaic_0001>
module attributes {stable_mosaic.version = 11 : i64} {
  func.func @vpg_kernel(%arg0: i32, %arg1: memref<8x6xf32, #tpu.memory_space<vmem>>, %arg2: memref<6x256xbf16, #tpu.memory_space<vmem>>, %arg3: memref<1x256xbf16, #tpu.memory_space<vmem>>, %arg4: memref<256x512xbf16, #tpu.memory_space<vmem>>, %arg5: memref<1x512xbf16, #tpu.memory_space<vmem>>, %arg6: memref<512x256xbf16, #tpu.memory_space<vmem>>, %arg7: memref<1x256xbf16, #tpu.memory_space<vmem>>, %arg8: memref<256x4xbf16, #tpu.memory_space<vmem>>, %arg9: memref<1x4xbf16, #tpu.memory_space<vmem>>, %arg10: memref<8x4xf32, #tpu.memory_space<vmem>>) attributes {dimension_semantics = [#tpu.dimension_semantics<parallel>], iteration_bounds = array<i64: 1>, scalar_prefetch = 0 : i64, scratch_operands = 0 : i64, tpu.core_type = #tpu.core_type<tc>, window_params = [{transform_indices = @transform_0, window_bounds = array<i64: 8, 6>}, {pipeline_mode = #tpu.pipeline_mode<synchronous>, transform_indices = @transform_1, window_bounds = array<i64: 6, 256>}, {pipeline_mode = #tpu.pipeline_mode<synchronous>, transform_indices = @transform_2, window_bounds = array<i64: 1, 256>}, {pipeline_mode = #tpu.pipeline_mode<synchronous>, transform_indices = @transform_3, window_bounds = array<i64: 256, 512>}, {pipeline_mode = #tpu.pipeline_mode<synchronous>, transform_indices = @transform_4, window_bounds = array<i64: 1, 512>}, {pipeline_mode = #tpu.pipeline_mode<synchronous>, transform_indices = @transform_5, window_bounds = array<i64: 512, 256>}, {pipeline_mode = #tpu.pipeline_mode<synchronous>, transform_indices = @transform_6, window_bounds = array<i64: 1, 256>}, {pipeline_mode = #tpu.pipeline_mode<synchronous>, transform_indices = @transform_7, window_bounds = array<i64: 256, 4>}, {pipeline_mode = #tpu.pipeline_mode<synchronous>, transform_indices = @transform_8, window_bounds = array<i64: 1, 4>}, {transform_indices = @transform_9, window_bounds = array<i64: 8, 4>}]} {
    %c0 = arith.constant 0 : index
    %c0_0 = arith.constant 0 : index
    %0 = vector.load %arg1[%c0, %c0_0] : memref<8x6xf32, #tpu.memory_space<vmem>>, vector<8x6xf32>
    %c0_1 = arith.constant 0 : index
    %c0_2 = arith.constant 0 : index
    %1 = vector.load %arg2[%c0_1, %c0_2] : memref<6x256xbf16, #tpu.memory_space<vmem>>, vector<6x256xbf16>
    %2 = arith.extf %1 : vector<6x256xbf16> to vector<6x256xf32>
    %c0_3 = arith.constant 0 : index
    %c0_4 = arith.constant 0 : index
    %3 = vector.load %arg3[%c0_3, %c0_4] : memref<1x256xbf16, #tpu.memory_space<vmem>>, vector<1x256xbf16>
    %4 = arith.extf %3 : vector<1x256xbf16> to vector<1x256xf32>
    %5 = vector.shape_cast %4 : vector<1x256xf32> to vector<1x256xf32>
    %6 = vector.broadcast %5 : vector<1x256xf32> to vector<8x256xf32>
    %7 = vector.extract_strided_slice %0 {offsets = [0, 0], sizes = [8, 1], strides = [1, 1]} : vector<8x6xf32> to vector<8x1xf32>
    %8 = vector.extract_strided_slice %2 {offsets = [0, 0], sizes = [1, 256], strides = [1, 1]} : vector<6x256xf32> to vector<1x256xf32>
    %9 = vector.broadcast %7 : vector<8x1xf32> to vector<8x256xf32>
    %10 = vector.broadcast %8 : vector<1x256xf32> to vector<8x256xf32>
    %11 = arith.mulf %9, %10 : vector<8x256xf32>
    %12 = arith.addf %6, %11 : vector<8x256xf32>
    %13 = vector.extract_strided_slice %0 {offsets = [0, 1], sizes = [8, 1], strides = [1, 1]} : vector<8x6xf32> to vector<8x1xf32>
    %14 = vector.extract_strided_slice %2 {offsets = [1, 0], sizes = [1, 256], strides = [1, 1]} : vector<6x256xf32> to vector<1x256xf32>
    %15 = vector.broadcast %13 : vector<8x1xf32> to vector<8x256xf32>
    %16 = vector.broadcast %14 : vector<1x256xf32> to vector<8x256xf32>
    %17 = arith.mulf %15, %16 : vector<8x256xf32>
    %18 = arith.addf %12, %17 : vector<8x256xf32>
    %19 = vector.extract_strided_slice %0 {offsets = [0, 2], sizes = [8, 1], strides = [1, 1]} : vector<8x6xf32> to vector<8x1xf32>
    %20 = vector.extract_strided_slice %2 {offsets = [2, 0], sizes = [1, 256], strides = [1, 1]} : vector<6x256xf32> to vector<1x256xf32>
    %21 = vector.broadcast %19 : vector<8x1xf32> to vector<8x256xf32>
    %22 = vector.broadcast %20 : vector<1x256xf32> to vector<8x256xf32>
    %23 = arith.mulf %21, %22 : vector<8x256xf32>
    %24 = arith.addf %18, %23 : vector<8x256xf32>
    %25 = vector.extract_strided_slice %0 {offsets = [0, 3], sizes = [8, 1], strides = [1, 1]} : vector<8x6xf32> to vector<8x1xf32>
    %26 = vector.extract_strided_slice %2 {offsets = [3, 0], sizes = [1, 256], strides = [1, 1]} : vector<6x256xf32> to vector<1x256xf32>
    %27 = vector.broadcast %25 : vector<8x1xf32> to vector<8x256xf32>
    %28 = vector.broadcast %26 : vector<1x256xf32> to vector<8x256xf32>
    %29 = arith.mulf %27, %28 : vector<8x256xf32>
    %30 = arith.addf %24, %29 : vector<8x256xf32>
    %31 = vector.extract_strided_slice %0 {offsets = [0, 4], sizes = [8, 1], strides = [1, 1]} : vector<8x6xf32> to vector<8x1xf32>
    %32 = vector.extract_strided_slice %2 {offsets = [4, 0], sizes = [1, 256], strides = [1, 1]} : vector<6x256xf32> to vector<1x256xf32>
    %33 = vector.broadcast %31 : vector<8x1xf32> to vector<8x256xf32>
    %34 = vector.broadcast %32 : vector<1x256xf32> to vector<8x256xf32>
    %35 = arith.mulf %33, %34 : vector<8x256xf32>
    %36 = arith.addf %30, %35 : vector<8x256xf32>
    %37 = vector.extract_strided_slice %0 {offsets = [0, 5], sizes = [8, 1], strides = [1, 1]} : vector<8x6xf32> to vector<8x1xf32>
    %38 = vector.extract_strided_slice %2 {offsets = [5, 0], sizes = [1, 256], strides = [1, 1]} : vector<6x256xf32> to vector<1x256xf32>
    %39 = vector.broadcast %37 : vector<8x1xf32> to vector<8x256xf32>
    %40 = vector.broadcast %38 : vector<1x256xf32> to vector<8x256xf32>
    %41 = arith.mulf %39, %40 : vector<8x256xf32>
    %42 = arith.addf %36, %41 : vector<8x256xf32>
    %cst = arith.constant 0.000000e+00 : f32
    %43 = vector.broadcast %cst : f32 to vector<8x256xf32>
    %44 = arith.maximumf %42, %43 : vector<8x256xf32>
    %45 = arith.truncf %44 : vector<8x256xf32> to vector<8x256xbf16>
    %c0_5 = arith.constant 0 : index
    %c0_6 = arith.constant 0 : index
    %46 = vector.load %arg4[%c0_5, %c0_6] : memref<256x512xbf16, #tpu.memory_space<vmem>>, vector<256x512xbf16>
    %cst_7 = arith.constant dense<0.000000e+00> : vector<8x512xf32>
    %47 = tpu.matmul %45, %46, %cst_7 {dimension_numbers = #tpu.dot_dimension_numbers<[1], [0], [0], [1], [0, 0, 1, 1], [], []>} : vector<8x256xbf16>, vector<256x512xbf16>, vector<8x512xf32> -> vector<8x512xf32>
    %c0_8 = arith.constant 0 : index
    %c0_9 = arith.constant 0 : index
    %48 = vector.load %arg5[%c0_8, %c0_9] : memref<1x512xbf16, #tpu.memory_space<vmem>>, vector<1x512xbf16>
    %49 = arith.extf %48 : vector<1x512xbf16> to vector<1x512xf32>
    %50 = vector.broadcast %49 : vector<1x512xf32> to vector<8x512xf32>
    %51 = arith.addf %47, %50 : vector<8x512xf32>
    %cst_10 = arith.constant 0.000000e+00 : f32
    %52 = vector.broadcast %cst_10 : f32 to vector<8x512xf32>
    %53 = arith.maximumf %51, %52 : vector<8x512xf32>
    %54 = arith.truncf %53 : vector<8x512xf32> to vector<8x512xbf16>
    %c0_11 = arith.constant 0 : index
    %c0_12 = arith.constant 0 : index
    %55 = vector.load %arg6[%c0_11, %c0_12] : memref<512x256xbf16, #tpu.memory_space<vmem>>, vector<512x256xbf16>
    %cst_13 = arith.constant dense<0.000000e+00> : vector<8x256xf32>
    %56 = tpu.matmul %54, %55, %cst_13 {dimension_numbers = #tpu.dot_dimension_numbers<[1], [0], [0], [1], [0, 0, 1, 1], [], []>} : vector<8x512xbf16>, vector<512x256xbf16>, vector<8x256xf32> -> vector<8x256xf32>
    %c0_14 = arith.constant 0 : index
    %c0_15 = arith.constant 0 : index
    %57 = vector.load %arg7[%c0_14, %c0_15] : memref<1x256xbf16, #tpu.memory_space<vmem>>, vector<1x256xbf16>
    %58 = arith.extf %57 : vector<1x256xbf16> to vector<1x256xf32>
    %59 = vector.broadcast %58 : vector<1x256xf32> to vector<8x256xf32>
    %60 = arith.addf %56, %59 : vector<8x256xf32>
    %cst_16 = arith.constant 0.000000e+00 : f32
    %61 = vector.broadcast %cst_16 : f32 to vector<8x256xf32>
    %62 = arith.maximumf %60, %61 : vector<8x256xf32>
    %63 = arith.truncf %62 : vector<8x256xf32> to vector<8x256xbf16>
    %c0_17 = arith.constant 0 : index
    %c0_18 = arith.constant 0 : index
    %64 = vector.load %arg8[%c0_17, %c0_18] : memref<256x4xbf16, #tpu.memory_space<vmem>>, vector<256x4xbf16>
    %cst_19 = arith.constant dense<0.000000e+00> : vector<8x4xf32>
    %65 = tpu.matmul %63, %64, %cst_19 {dimension_numbers = #tpu.dot_dimension_numbers<[1], [0], [0], [1], [0, 0, 1, 1], [], []>} : vector<8x256xbf16>, vector<256x4xbf16>, vector<8x4xf32> -> vector<8x4xf32>
    %c0_20 = arith.constant 0 : index
    %c0_21 = arith.constant 0 : index
    %66 = vector.load %arg9[%c0_20, %c0_21] : memref<1x4xbf16, #tpu.memory_space<vmem>>, vector<1x4xbf16>
    %67 = arith.extf %66 : vector<1x4xbf16> to vector<1x4xf32>
    %68 = vector.broadcast %67 : vector<1x4xf32> to vector<8x4xf32>
    %69 = arith.addf %65, %68 : vector<8x4xf32>
    %cst_22 = arith.constant 2.000000e+01 : f32
    %70 = vector.broadcast %cst_22 : f32 to vector<8x4xf32>
    %71 = arith.cmpf ogt, %69, %70 : vector<8x4xf32>
    %cst_23 = arith.constant 2.000000e+01 : f32
    %72 = vector.broadcast %cst_23 : f32 to vector<8x4xf32>
    %73 = arith.minimumf %69, %72 : vector<8x4xf32>
    %74 = math.exp %73 : vector<8x4xf32>
    %75 = math.log1p %74 : vector<8x4xf32>
    %76 = arith.select %71, %69, %75 : vector<8x4xi1>, vector<8x4xf32>
    %cst_24 = arith.constant 5.000000e-02 : f32
    %77 = vector.broadcast %cst_24 : f32 to vector<8x4xf32>
    %78 = arith.addf %76, %77 : vector<8x4xf32>
    %79 = tpu.iota {dimensions = array<i32: 1>} : vector<8x4xi32>
    %c2_i32 = arith.constant 2 : i32
    %80 = vector.broadcast %c2_i32 : i32 to vector<8x4xi32>
    %81 = arith.cmpi sge, %79, %80 : vector<8x4xi32>
    %82 = arith.select %81, %78, %69 : vector<8x4xi1>, vector<8x4xf32>
    %c0_25 = arith.constant 0 : index
    %c0_26 = arith.constant 0 : index
    %83 = vector.load %arg10[%c0_25, %c0_26] : memref<8x4xf32, #tpu.memory_space<vmem>>, vector<8x4xf32>
    tpu.vector_store %arg10[%c0_25, %c0_26], %82 {strides = array<i32>} : memref<8x4xf32, #tpu.memory_space<vmem>>, vector<8x4xf32>,
    return
  }
  func.func @transform_0(%arg0: i32) -> (i32, i32) {
    %c0_i32 = arith.constant 0 : i32
    %c0_i32_0 = arith.constant 0 : i32
    return %arg0, %c0_i32 : i32, i32
  }
  func.func @transform_1(%arg0: i32) -> (i32, i32) {
    %c0_i32 = arith.constant 0 : i32
    %c0_i32_0 = arith.constant 0 : i32
    %c0_i32_1 = arith.constant 0 : i32
    return %c0_i32, %c0_i32_0 : i32, i32
  }
  func.func @transform_2(%arg0: i32) -> (i32, i32) {
    %c0_i32 = arith.constant 0 : i32
    %c0_i32_0 = arith.constant 0 : i32
    %c0_i32_1 = arith.constant 0 : i32
    return %c0_i32, %c0_i32_0 : i32, i32
  }
  func.func @transform_3(%arg0: i32) -> (i32, i32) {
    %c0_i32 = arith.constant 0 : i32
    %c0_i32_0 = arith.constant 0 : i32
    %c0_i32_1 = arith.constant 0 : i32
    return %c0_i32, %c0_i32_0 : i32, i32
  }
  func.func @transform_4(%arg0: i32) -> (i32, i32) {
    %c0_i32 = arith.constant 0 : i32
    %c0_i32_0 = arith.constant 0 : i32
    %c0_i32_1 = arith.constant 0 : i32
    return %c0_i32, %c0_i32_0 : i32, i32
  }
  func.func @transform_5(%arg0: i32) -> (i32, i32) {
    %c0_i32 = arith.constant 0 : i32
    %c0_i32_0 = arith.constant 0 : i32
    %c0_i32_1 = arith.constant 0 : i32
    return %c0_i32, %c0_i32_0 : i32, i32
  }
  func.func @transform_6(%arg0: i32) -> (i32, i32) {
    %c0_i32 = arith.constant 0 : i32
    %c0_i32_0 = arith.constant 0 : i32
    %c0_i32_1 = arith.constant 0 : i32
    return %c0_i32, %c0_i32_0 : i32, i32
  }
  func.func @transform_7(%arg0: i32) -> (i32, i32) {
    %c0_i32 = arith.constant 0 : i32
    %c0_i32_0 = arith.constant 0 : i32
    %c0_i32_1 = arith.constant 0 : i32
    return %c0_i32, %c0_i32_0 : i32, i32
  }
  func.func @transform_8(%arg0: i32) -> (i32, i32) {
    %c0_i32 = arith.constant 0 : i32
    %c0_i32_0 = arith.constant 0 : i32
    %c0_i32_1 = arith.constant 0 : i32
    return %c0_i32, %c0_i32_0 : i32, i32
  }
  func.func @transform_9(%arg0: i32) -> (i32, i32) {
    %c0_i32 = arith.constant 0 : i32
    %c0_i32_0 = arith.constant 0 : i32
    return %arg0, %c0_i32 : i32, i32
  }
}

</mosaic_0001>

<llo_original>
// kernel: tpu_custom_call.1
$region0: #{tpu_custom_call.1}
  #allocation0 [shape = 'u32[]', space=smem, size = 0x4, offset = 0x4, fixed_abs, tag = 'smem constant byte address 0x4 - core index']
  #allocation1 [shape = 'u32[144,128]{1,0:T(1,128)}', space=vmem, size = 0x12000, scoped, tag = 'internal scratch']
  %s0 = inlined_call_operand.vmem [shape: f32[8,6], index: 0, kind: input, shape index: {}]
  %s1 = inlined_call_operand.vmem [shape: bf16[6,256], index: 1, kind: input, shape index: {}]
  %s2 = inlined_call_operand.vmem [shape: bf16[1,256], index: 2, kind: input, shape index: {}]
  %s3 = inlined_call_operand.hbm [shape: bf16[256,512], index: 3, kind: input, shape index: {}]
  %s4 = inlined_call_operand.vmem [shape: bf16[1,512], index: 4, kind: input, shape index: {}]
  %s5 = inlined_call_operand.hbm [shape: bf16[512,256], index: 5, kind: input, shape index: {}]
  %s6 = inlined_call_operand.vmem [shape: bf16[1,256], index: 6, kind: input, shape index: {}]
  %s7 = inlined_call_operand.vmem [shape: bf16[256,4], index: 7, kind: input, shape index: {}]
  %s8 = inlined_call_operand.vmem [shape: bf16[1,4], index: 8, kind: input, shape index: {}]
  %s9 = inlined_call_operand.vmem [shape: f32[8,4], index: 9, kind: output, shape index: {}]
  %s10 = sld [smem:[#allocation0]]
  $region54: #{tpu_custom_call.1} parent=0
    _
  %s12 = ssub.s32 1, %s10
  %s13 = scalar_select 0, %s12, %s10
  $region1: #{tpu_custom_call.1} parent=0
    #allocation2 [shape = 'u8[262144]{0}', space=vmem, size = 0x40000, scoped, tag = 'input window, operand 3, single buffered']
    #allocation3 [shape = 's32[1]{0}', space=sflag, size = 0x4, scoped, tag = 'scoped memory for tpu_custom_call.1']
    #allocation4 [shape = 'u8[262144]{0}', space=vmem, size = 0x40000, scoped, tag = 'input window, operand 5, single buffered']
    #allocation5 [shape = 's32[1]{0}', space=sflag, size = 0x4, scoped, tag = 'scoped memory for tpu_custom_call.1']
    %14 = vsyncpa [#allocation3], 0
    %15 = vsyncpa [#allocation5], 0
    // Predicated region
    $region2: #{tpu_custom_call.1} parent=1 // pred_check
      _
    $region3: #{tpu_custom_call.1} parent=1 // pred_check_branch
      %17 = sbr.rel (0) target = $region5
    $region4: #{tpu_custom_call.1} parent=1 // pred_region
      _
    $region5: #{tpu_custom_call.1} parent=1 // pred_fallthru
      _
    // Predicated region
    $region6: #{tpu_custom_call.1} parent=1 // pred_check
      _
    $region7: #{tpu_custom_call.1} parent=1 // pred_check_branch
      %19 = sbr.rel (0) target = $region9
    $region8: #{tpu_custom_call.1} parent=1 // pred_region
      _
    $region9: #{tpu_custom_call.1} parent=1 // pred_fallthru
      _
    // Predicated region
    $region10: #{tpu_custom_call.1} parent=1 // pred_check
      _
    $region11: #{tpu_custom_call.1} parent=1 // pred_check_branch
      %21 = sbr.rel (0) target = $region13
    $region12: #{tpu_custom_call.1} parent=1 // pred_region
      _
    $region13: #{tpu_custom_call.1} parent=1 // pred_fallthru
      _
    // Predicated region
    $region14: #{tpu_custom_call.1} parent=1 // pred_check
      _
    $region15: #{tpu_custom_call.1} parent=1 // pred_check_branch
      %23 = sbr.rel (0) target = $region17
    $region16: #{tpu_custom_call.1} parent=1 // pred_region
      %s25 = ssub.s32 8192, 8192
      %26 = vsyncadd [#allocation3], %s25
      %s27 = sshll.u32 [#allocation2], 4
      %s28 = int_to_ptr.vmem [resolvable:$true] %s27
      %33 = dma.hbm_to_vmem [thread:$0]  %s3, 8192, %s28, [#allocation3], 256, 256, 16
    $region17: #{tpu_custom_call.1} parent=1 // pred_fallthru
      _
    // Predicated region
    $region18: #{tpu_custom_call.1} parent=1 // pred_check
      _
    $region19: #{tpu_custom_call.1} parent=1 // pred_check_branch
      %35 = sbr.rel (0) target = $region21
    $region20: #{tpu_custom_call.1} parent=1 // pred_region
      _
    $region21: #{tpu_custom_call.1} parent=1 // pred_fallthru
      _
    // Predicated region
    $region22: #{tpu_custom_call.1} parent=1 // pred_check
      _
    $region23: #{tpu_custom_call.1} parent=1 // pred_check_branch
      %37 = sbr.rel (0) target = $region25
    $region24: #{tpu_custom_call.1} parent=1 // pred_region
      %s39 = ssub.s32 8192, 8192
      %40 = vsyncadd [#allocation5], %s39
      %s41 = sshll.u32 [#allocation4], 4
      %s42 = int_to_ptr.vmem [resolvable:$true] %s41
      %47 = dma.hbm_to_vmem [thread:$0]  %s5, 8192, %s42, [#allocation5], 128, 128, 8
    $region25: #{tpu_custom_call.1} parent=1 // pred_fallthru
      _
    // Predicated region
    $region26: #{tpu_custom_call.1} parent=1 // pred_check
      _
    $region27: #{tpu_custom_call.1} parent=1 // pred_check_branch
      %49 = sbr.rel (0) target = $region29
    $region28: #{tpu_custom_call.1} parent=1 // pred_region
      _
    $region29: #{tpu_custom_call.1} parent=1 // pred_fallthru
      _
    // Predicated region
    $region30: #{tpu_custom_call.1} parent=1 // pred_check
      _
    $region31: #{tpu_custom_call.1} parent=1 // pred_check_branch
      %51 = sbr.rel (0) target = $region33
    $region32: #{tpu_custom_call.1} parent=1 // pred_region
      _
    $region33: #{tpu_custom_call.1} parent=1 // pred_fallthru
      _
    // Predicated region
    $region34: #{tpu_custom_call.1} parent=1 // pred_check
      _
    $region35: #{tpu_custom_call.1} parent=1 // pred_check_branch
      %53 = sbr.rel (0) target = $region37
    $region36: #{tpu_custom_call.1} parent=1 // pred_region
      _
    $region37: #{tpu_custom_call.1} parent=1 // pred_fallthru
      _
    // Predicated region
    $region38: #{tpu_custom_call.1} parent=1 // pred_check
      _
    $region39: #{tpu_custom_call.1} parent=1 // pred_check_branch
      %55 = sbr.rel (0) target = $region41
    $region40: #{tpu_custom_call.1} parent=1 // pred_region
      %56 = dma.done [#allocation3], 8192
    $region41: #{tpu_custom_call.1} parent=1 // pred_fallthru
      _
    // Predicated region
    $region42: #{tpu_custom_call.1} parent=1 // pred_check
      _
    $region43: #{tpu_custom_call.1} parent=1 // pred_check_branch
      %58 = sbr.rel (0) target = $region45
    $region44: #{tpu_custom_call.1} parent=1 // pred_region
      %59 = dma.done [#allocation5], 8192
    $region45: #{tpu_custom_call.1} parent=1 // pred_fallthru
      _
    %v61 = vld [vmem:[%s0] sm:$0xff]
    %v62 = vld [vmem:[%s1] sm:$0x77]
    %v63 = vunpack.c.l.bf16 %v62
    %v64 = vunpack.c.h.bf16 %v62
    %v65 = vld [vmem:[%s2] sm:$0x3]
    %v66 = vunpack.c.l.bf16 %v65
    %v68 = vlaneseq
    %v69 = vshrl.u32 %v68, 7
    %v70 = vsub.s32 0, %v69
    %v71 = vrot.slane %v66, %v70
    %v72 = vlaneseq
    %v73 = vshrl.u32 %v72, 7
    %v74 = vsub.s32 2, %v73
    %v75 = vrot.slane %v66, %v74
    %v78 = vlaneseq
    %v79 = vshrl.u32 %v78, 7
    %v80 = vsub.s32 0, %v79
    %v81 = vrot.slane %v71, %v80
    %v82 = vlaneseq
    %v83 = vshrl.u32 %v82, 7
    %v84 = vsub.s32 0, %v83
    %v85 = vrot.slane %v75, %v84
    %87 = vset.pattern.permute.xlu0 0
    %88 = vperm.xlu0 %87, %v61
    %v89 = vpop.permute.xlu0 %88
    %v91 = vlaneseq
    %v92 = vshrl.u32 %v91, 7
    %v93 = vsub.s32 0, %v92
    %v94 = vrot.slane %v63, %v93
    %v95 = vlaneseq
    %v96 = vshrl.u32 %v95, 7
    %v97 = vsub.s32 0, %v96
    %v98 = vrot.slane %v64, %v97
    %v99 = vmul.f32 %v89, %v94
    %v100 = vmul.f32 %v89, %v98
    %v101 = vadd.f32 %v81, %v99
    %v102 = vadd.f32 %v85, %v100
    %103 = vset.pattern.permute.xlu0 1
    %104 = vperm.xlu0 %103, %v61
    %v105 = vpop.permute.xlu0 %104
    %v107 = vlaneseq
    %v108 = vshrl.u32 %v107, 7
    %v109 = vsub.s32 1, %v108
    %v110 = vrot.slane %v63, %v109
    %v111 = vlaneseq
    %v112 = vshrl.u32 %v111, 7
    %v113 = vsub.s32 1, %v112
    %v114 = vrot.slane %v64, %v113
    %v115 = vmul.f32 %v105, %v110
    %v116 = vmul.f32 %v105, %v114
    %v117 = vadd.f32 %v101, %v115
    %v118 = vadd.f32 %v102, %v116
    %119 = vset.pattern.permute.xlu0 2
    %120 = vperm.xlu0 %119, %v61
    %v121 = vpop.permute.xlu0 %120
    %v123 = vlaneseq
    %v124 = vshrl.u32 %v123, 7
    %v125 = vsub.s32 2, %v124
    %v126 = vrot.slane %v63, %v125
    %v127 = vlaneseq
    %v128 = vshrl.u32 %v127, 7
    %v129 = vsub.s32 2, %v128
    %v130 = vrot.slane %v64, %v129
    %v131 = vmul.f32 %v121, %v126
    %v132 = vmul.f32 %v121, %v130
    %v133 = vadd.f32 %v117, %v131
    %v134 = vadd.f32 %v118, %v132
    %135 = vset.pattern.permute.xlu0 3
    %136 = vperm.xlu0 %135, %v61
    %v137 = vpop.permute.xlu0 %136
    %v139 = vlaneseq
    %v140 = vshrl.u32 %v139, 7
    %v141 = vsub.s32 3, %v140
    %v142 = vrot.slane %v63, %v141
    %v143 = vlaneseq
    %v144 = vshrl.u32 %v143, 7
    %v145 = vsub.s32 3, %v144
    %v146 = vrot.slane %v64, %v145
    %v147 = vmul.f32 %v137, %v142
    %v148 = vmul.f32 %v137, %v146
    %v149 = vadd.f32 %v133, %v147
    %v150 = vadd.f32 %v134, %v148
    %151 = vset.pattern.permute.xlu0 4
    %152 = vperm.xlu0 %151, %v61
    %v153 = vpop.permute.xlu0 %152
    %v155 = vlaneseq
    %v156 = vshrl.u32 %v155, 7
    %v157 = vsub.s32 4, %v156
    %v158 = vrot.slane %v63, %v157
    %v159 = vlaneseq
    %v160 = vshrl.u32 %v159, 7
    %v161 = vsub.s32 4, %v160
    %v162 = vrot.slane %v64, %v161
    %v163 = vmul.f32 %v153, %v158
    %v164 = vmul.f32 %v153, %v162
    %v165 = vadd.f32 %v149, %v163
    %v166 = vadd.f32 %v150, %v164
    %167 = vset.pattern.permute.xlu0 5
    %168 = vperm.xlu0 %167, %v61
    %v169 = vpop.permute.xlu0 %168
    %v171 = vlaneseq
    %v172 = vshrl.u32 %v171, 7
    %v173 = vsub.s32 5, %v172
    %v174 = vrot.slane %v63, %v173
    %v175 = vlaneseq
    %v176 = vshrl.u32 %v175, 7
    %v177 = vsub.s32 5, %v176
    %v178 = vrot.slane %v64, %v177
    %v179 = vmul.f32 %v169, %v174
    %v180 = vmul.f32 %v169, %v178
    %v181 = vadd.f32 %v165, %v179
    %v182 = vadd.f32 %v166, %v180
    %v183 = vmax.f32 %v181, 0.0
    %v184 = vmax.f32 %v182, 0.0
    %v185 = vpack.c.bf16 %v183, %v183
    %v186 = vpack.c.bf16 %v184, %v184
    %v187 = vld [vmem:[#allocation2] sm:$0xff]
    %v188 = vld [vmem:[#allocation2 + $0x8] sm:$0xff]
    %v189 = vld [vmem:[#allocation2 + $0x10] sm:$0xff]
    %v190 = vld [vmem:[#allocation2 + $0x18] sm:$0xff]
    %v191 = vld [vmem:[#allocation2 + $0x20] sm:$0xff]
    %v192 = vld [vmem:[#allocation2 + $0x28] sm:$0xff]
    %v193 = vld [vmem:[#allocation2 + $0x30] sm:$0xff]
    %v194 = vld [vmem:[#allocation2 + $0x38] sm:$0xff]
    %v195 = vld [vmem:[#allocation2 + $0x40] sm:$0xff]
    %v196 = vld [vmem:[#allocation2 + $0x48] sm:$0xff]
    %v197 = vld [vmem:[#allocation2 + $0x50] sm:$0xff]
    %v198 = vld [vmem:[#allocation2 + $0x58] sm:$0xff]
    %v199 = vld [vmem:[#allocation2 + $0x60] sm:$0xff]
    %v200 = vld [vmem:[#allocation2 + $0x68] sm:$0xff]
    %v201 = vld [vmem:[#allocation2 + $0x70] sm:$0xff]
    %v202 = vld [vmem:[#allocation2 + $0x78] sm:$0xff]
    %v203 = vld [vmem:[#allocation2 + $0x80] sm:$0xff]
    %v204 = vld [vmem:[#allocation2 + $0x88] sm:$0xff]
    %v205 = vld [vmem:[#allocation2 + $0x90] sm:$0xff]
    %v206 = vld [vmem:[#allocation2 + $0x98] sm:$0xff]
    %v207 = vld [vmem:[#allocation2 + $0xa0] sm:$0xff]
    %v208 = vld [vmem:[#allocation2 + $0xa8] sm:$0xff]
    %v209 = vld [vmem:[#allocation2 + $0xb0] sm:$0xff]
    %v210 = vld [vmem:[#allocation2 + $0xb8] sm:$0xff]
    %v211 = vld [vmem:[#allocation2 + $0xc0] sm:$0xff]
    %v212 = vld [vmem:[#allocation2 + $0xc8] sm:$0xff]
    %v213 = vld [vmem:[#allocation2 + $0xd0] sm:$0xff]
    %v214 = vld [vmem:[#allocation2 + $0xd8] sm:$0xff]
    %v215 = vld [vmem:[#allocation2 + $0xe0] sm:$0xff]
    %v216 = vld [vmem:[#allocation2 + $0xe8] sm:$0xff]
    %v217 = vld [vmem:[#allocation2 + $0xf0] sm:$0xff]
    %v218 = vld [vmem:[#allocation2 + $0xf8] sm:$0xff]
    %v219 = vld [vmem:[#allocation2 + $0x100] sm:$0xff]
    %v220 = vld [vmem:[#allocation2 + $0x108] sm:$0xff]
    %v221 = vld [vmem:[#allocation2 + $0x110] sm:$0xff]
    %v222 = vld [vmem:[#allocation2 + $0x118] sm:$0xff]
    %v223 = vld [vmem:[#allocation2 + $0x120] sm:$0xff]
    %v224 = vld [vmem:[#allocation2 + $0x128] sm:$0xff]
    %v225 = vld [vmem:[#allocation2 + $0x130] sm:$0xff]
    %v226 = vld [vmem:[#allocation2 + $0x138] sm:$0xff]
    %v227 = vld [vmem:[#allocation2 + $0x140] sm:$0xff]
    %v228 = vld [vmem:[#allocation2 + $0x148] sm:$0xff]
    %v229 = vld [vmem:[#allocation2 + $0x150] sm:$0xff]
    %v230 = vld [vmem:[#allocation2 + $0x158] sm:$0xff]
    %v231 = vld [vmem:[#allocation2 + $0x160] sm:$0xff]
    %v232 = vld [vmem:[#allocation2 + $0x168] sm:$0xff]
    %v233 = vld [vmem:[#allocation2 + $0x170] sm:$0xff]
    %v234 = vld [vmem:[#allocation2 + $0x178] sm:$0xff]
    %v235 = vld [vmem:[#allocation2 + $0x180] sm:$0xff]
    %v236 = vld [vmem:[#allocation2 + $0x188] sm:$0xff]
    %v237 = vld [vmem:[#allocation2 + $0x190] sm:$0xff]
    %v238 = vld [vmem:[#allocation2 + $0x198] sm:$0xff]
    %v239 = vld [vmem:[#allocation2 + $0x1a0] sm:$0xff]
    %v240 = vld [vmem:[#allocation2 + $0x1a8] sm:$0xff]
    %v241 = vld [vmem:[#allocation2 + $0x1b0] sm:$0xff]
    %v242 = vld [vmem:[#allocation2 + $0x1b8] sm:$0xff]
    %v243 = vld [vmem:[#allocation2 + $0x1c0] sm:$0xff]
    %v244 = vld [vmem:[#allocation2 + $0x1c8] sm:$0xff]
    %v245 = vld [vmem:[#allocation2 + $0x1d0] sm:$0xff]
    %v246 = vld [vmem:[#allocation2 + $0x1d8] sm:$0xff]
    %v247 = vld [vmem:[#allocation2 + $0x1e0] sm:$0xff]
    %v248 = vld [vmem:[#allocation2 + $0x1e8] sm:$0xff]
    %v249 = vld [vmem:[#allocation2 + $0x1f0] sm:$0xff]
    %v250 = vld [vmem:[#allocation2 + $0x1f8] sm:$0xff]
    %v251 = vld [vmem:[%s4] sm:$0xf]
    %v252 = vunpack.c.l.bf16 %v251
    %v254 = vlaneseq
    %v255 = vshrl.u32 %v254, 7
    %v256 = vsub.s32 0, %v255
    %v257 = vrot.slane %v252, %v256
    %v258 = vlaneseq
    %v259 = vshrl.u32 %v258, 7
    %v260 = vsub.s32 2, %v259
    %v261 = vrot.slane %v252, %v260
    %v262 = vlaneseq
    %v263 = vshrl.u32 %v262, 7
    %v264 = vsub.s32 4, %v263
    %v265 = vrot.slane %v252, %v264
    %v266 = vlaneseq
    %v267 = vshrl.u32 %v266, 7
    %v268 = vsub.s32 6, %v267
    %v269 = vrot.slane %v252, %v268
    %v274 = vlaneseq
    %v275 = vshrl.u32 %v274, 7
    %v276 = vsub.s32 0, %v275
    %v277 = vrot.slane %v257, %v276
    %v278 = vlaneseq
    %v279 = vshrl.u32 %v278, 7
    %v280 = vsub.s32 0, %v279
    %v281 = vrot.slane %v261, %v280
    %v282 = vlaneseq
    %v283 = vshrl.u32 %v282, 7
    %v284 = vsub.s32 0, %v283
    %v285 = vrot.slane %v265, %v284
    %v286 = vlaneseq
    %v287 = vshrl.u32 %v286, 7
    %v288 = vsub.s32 0, %v287
    %v289 = vrot.slane %v269, %v288
    %v354 = vunpack.c.l.b16 %v187
    %v355 = vunpack.c.h.b16 %v187
    %v356 = vunpack.c.l.b16 %v188
    %v357 = vunpack.c.h.b16 %v188
    %v358 = vunpack.c.l.b16 %v189
    %v359 = vunpack.c.h.b16 %v189
    %v360 = vunpack.c.l.b16 %v190
    %v361 = vunpack.c.h.b16 %v190
    %v362 = vunpack.c.l.b16 %v191
    %v363 = vunpack.c.h.b16 %v191
    %v364 = vunpack.c.l.b16 %v192
    %v365 = vunpack.c.h.b16 %v192
    %v366 = vunpack.c.l.b16 %v193
    %v367 = vunpack.c.h.b16 %v193
    %v368 = vunpack.c.l.b16 %v194
    %v369 = vunpack.c.h.b16 %v194
    %v370 = vunpack.c.l.b16 %v195
    %v371 = vunpack.c.h.b16 %v195
    %v372 = vunpack.c.l.b16 %v196
    %v373 = vunpack.c.h.b16 %v196
    %v374 = vunpack.c.l.b16 %v197
    %v375 = vunpack.c.h.b16 %v197
    %v376 = vunpack.c.l.b16 %v198
    %v377 = vunpack.c.h.b16 %v198
    %v378 = vunpack.c.l.b16 %v199
    %v379 = vunpack.c.h.b16 %v199
    %v380 = vunpack.c.l.b16 %v200
    %v381 = vunpack.c.h.b16 %v200
    %v382 = vunpack.c.l.b16 %v201
    %v383 = vunpack.c.h.b16 %v201
    %v384 = vunpack.c.l.b16 %v202
    %v385 = vunpack.c.h.b16 %v202
    %v386 = vunpack.c.l.b16 %v203
    %v387 = vunpack.c.h.b16 %v203
    %v388 = vunpack.c.l.b16 %v204
    %v389 = vunpack.c.h.b16 %v204
    %v390 = vunpack.c.l.b16 %v205
    %v391 = vunpack.c.h.b16 %v205
    %v392 = vunpack.c.l.b16 %v206
    %v393 = vunpack.c.h.b16 %v206
    %v394 = vunpack.c.l.b16 %v207
    %v395 = vunpack.c.h.b16 %v207
    %v396 = vunpack.c.l.b16 %v208
    %v397 = vunpack.c.h.b16 %v208
    %v398 = vunpack.c.l.b16 %v209
    %v399 = vunpack.c.h.b16 %v209
    %v400 = vunpack.c.l.b16 %v210
    %v401 = vunpack.c.h.b16 %v210
    %v402 = vunpack.c.l.b16 %v211
    %v403 = vunpack.c.h.b16 %v211
    %v404 = vunpack.c.l.b16 %v212
    %v405 = vunpack.c.h.b16 %v212
    %v406 = vunpack.c.l.b16 %v213
    %v407 = vunpack.c.h.b16 %v213
    %v408 = vunpack.c.l.b16 %v214
    %v409 = vunpack.c.h.b16 %v214
    %v410 = vunpack.c.l.b16 %v215
    %v411 = vunpack.c.h.b16 %v215
    %v412 = vunpack.c.l.b16 %v216
    %v413 = vunpack.c.h.b16 %v216
    %v414 = vunpack.c.l.b16 %v217
    %v415 = vunpack.c.h.b16 %v217
    %v416 = vunpack.c.l.b16 %v218
    %v417 = vunpack.c.h.b16 %v218
    %v418 = vunpack.c.l.b16 %v219
    %v419 = vunpack.c.h.b16 %v219
    %v420 = vunpack.c.l.b16 %v220
    %v421 = vunpack.c.h.b16 %v220
    %v422 = vunpack.c.l.b16 %v221
    %v423 = vunpack.c.h.b16 %v221
    %v424 = vunpack.c.l.b16 %v222
    %v425 = vunpack.c.h.b16 %v222
    %v426 = vunpack.c.l.b16 %v223
    %v427 = vunpack.c.h.b16 %v223
    %v428 = vunpack.c.l.b16 %v224
    %v429 = vunpack.c.h.b16 %v224
    %v430 = vunpack.c.l.b16 %v225
    %v431 = vunpack.c.h.b16 %v225
    %v432 = vunpack.c.l.b16 %v226
    %v433 = vunpack.c.h.b16 %v226
    %v434 = vunpack.c.l.b16 %v227
    %v435 = vunpack.c.h.b16 %v227
    %v436 = vunpack.c.l.b16 %v228
    %v437 = vunpack.c.h.b16 %v228
    %v438 = vunpack.c.l.b16 %v229
    %v439 = vunpack.c.h.b16 %v229
    %v440 = vunpack.c.l.b16 %v230
    %v441 = vunpack.c.h.b16 %v230
    %v442 = vunpack.c.l.b16 %v231
    %v443 = vunpack.c.h.b16 %v231
    %v444 = vunpack.c.l.b16 %v232
    %v445 = vunpack.c.h.b16 %v232
    %v446 = vunpack.c.l.b16 %v233
    %v447 = vunpack.c.h.b16 %v233
    %v448 = vunpack.c.l.b16 %v234
    %v449 = vunpack.c.h.b16 %v234
    %v450 = vunpack.c.l.b16 %v235
    %v451 = vunpack.c.h.b16 %v235
    %v452 = vunpack.c.l.b16 %v236
    %v453 = vunpack.c.h.b16 %v236
    %v454 = vunpack.c.l.b16 %v237
    %v455 = vunpack.c.h.b16 %v237
    %v456 = vunpack.c.l.b16 %v238
    %v457 = vunpack.c.h.b16 %v238
    %v458 = vunpack.c.l.b16 %v239
    %v459 = vunpack.c.h.b16 %v239
    %v460 = vunpack.c.l.b16 %v240
    %v461 = vunpack.c.h.b16 %v240
    %v462 = vunpack.c.l.b16 %v241
    %v463 = vunpack.c.h.b16 %v241
    %v464 = vunpack.c.l.b16 %v242
    %v465 = vunpack.c.h.b16 %v242
    %v466 = vunpack.c.l.b16 %v243
    %v467 = vunpack.c.h.b16 %v243
    %v468 = vunpack.c.l.b16 %v244
    %v469 = vunpack.c.h.b16 %v244
    %v470 = vunpack.c.l.b16 %v245
    %v471 = vunpack.c.h.b16 %v245
    %v472 = vunpack.c.l.b16 %v246
    %v473 = vunpack.c.h.b16 %v246
    %v474 = vunpack.c.l.b16 %v247
    %v475 = vunpack.c.h.b16 %v247
    %v476 = vunpack.c.l.b16 %v248
    %v477 = vunpack.c.h.b16 %v248
    %v478 = vunpack.c.l.b16 %v249
    %v479 = vunpack.c.h.b16 %v249
    %v480 = vunpack.c.l.b16 %v250
    %v481 = vunpack.c.h.b16 %v250
    %v482 = vpack.c.b16 %v358, %v354
    %v483 = vpack.c.b16 %v359, %v355
    %v484 = vpack.c.b16 %v360, %v356
    %v485 = vpack.c.b16 %v361, %v357
    %v486 = vpack.c.b16 %v366, %v362
    %v487 = vpack.c.b16 %v367, %v363
    %v488 = vpack.c.b16 %v368, %v364
    %v489 = vpack.c.b16 %v369, %v365
    %v490 = vpack.c.b16 %v374, %v370
    %v491 = vpack.c.b16 %v375, %v371
    %v492 = vpack.c.b16 %v376, %v372
    %v493 = vpack.c.b16 %v377, %v373
    %v494 = vpack.c.b16 %v382, %v378
    %v495 = vpack.c.b16 %v383, %v379
    %v496 = vpack.c.b16 %v384, %v380
    %v497 = vpack.c.b16 %v385, %v381
    %v498 = vpack.c.b16 %v390, %v386
    %v499 = vpack.c.b16 %v391, %v387
    %v500 = vpack.c.b16 %v392, %v388
    %v501 = vpack.c.b16 %v393, %v389
    %v502 = vpack.c.b16 %v398, %v394
    %v503 = vpack.c.b16 %v399, %v395
    %v504 = vpack.c.b16 %v400, %v396
    %v505 = vpack.c.b16 %v401, %v397
    %v506 = vpack.c.b16 %v406, %v402
    %v507 = vpack.c.b16 %v407, %v403
    %v508 = vpack.c.b16 %v408, %v404
    %v509 = vpack.c.b16 %v409, %v405
    %v510 = vpack.c.b16 %v414, %v410
    %v511 = vpack.c.b16 %v415, %v411
    %v512 = vpack.c.b16 %v416, %v412
    %v513 = vpack.c.b16 %v417, %v413
    %v514 = vpack.c.b16 %v422, %v418
    %v515 = vpack.c.b16 %v423, %v419
    %v516 = vpack.c.b16 %v424, %v420
    %v517 = vpack.c.b16 %v425, %v421
    %v518 = vpack.c.b16 %v430, %v426
    %v519 = vpack.c.b16 %v431, %v427
    %v520 = vpack.c.b16 %v432, %v428
    %v521 = vpack.c.b16 %v433, %v429
    %v522 = vpack.c.b16 %v438, %v434
    %v523 = vpack.c.b16 %v439, %v435
    %v524 = vpack.c.b16 %v440, %v436
    %v525 = vpack.c.b16 %v441, %v437
    %v526 = vpack.c.b16 %v446, %v442
    %v527 = vpack.c.b16 %v447, %v443
    %v528 = vpack.c.b16 %v448, %v444
    %v529 = vpack.c.b16 %v449, %v445
    %v530 = vpack.c.b16 %v454, %v450
    %v531 = vpack.c.b16 %v455, %v451
    %v532 = vpack.c.b16 %v456, %v452
    %v533 = vpack.c.b16 %v457, %v453
    %v534 = vpack.c.b16 %v462, %v458
    %v535 = vpack.c.b16 %v463, %v459
    %v536 = vpack.c.b16 %v464, %v460
    %v537 = vpack.c.b16 %v465, %v461
    %v538 = vpack.c.b16 %v470, %v466
    %v539 = vpack.c.b16 %v471, %v467
    %v540 = vpack.c.b16 %v472, %v468
    %v541 = vpack.c.b16 %v473, %v469
    %v542 = vpack.c.b16 %v478, %v474
    %v543 = vpack.c.b16 %v479, %v475
    %v544 = vpack.c.b16 %v480, %v476
    %v545 = vpack.c.b16 %v481, %v477
    %610 = vmatprep.subr.bf16.mxu0 %v483
    %611 = vmatpush1.bf16.msra.mxu0 %v482
    %612 = vmatprep.subr.bf16.mxu0 %v487
    %613 = vmatpush1.bf16.msra.mxu0 %v486
    %614 = vmatprep.subr.bf16.mxu0 %v491
    %615 = vmatpush1.bf16.msra.mxu0 %v490
    %616 = vmatprep.subr.bf16.mxu0 %v495
    %617 = vmatpush1.bf16.msra.mxu0 %v494
    %618 = vmatprep.subr.bf16.mxu0 %v499
    %619 = vmatpush1.bf16.msra.mxu0 %v498
    %620 = vmatprep.subr.bf16.mxu0 %v503
    %621 = vmatpush1.bf16.msra.mxu0 %v502
    %622 = vmatprep.subr.bf16.mxu0 %v507
    %623 = vmatpush1.bf16.msra.mxu0 %v506
    %624 = vmatprep.subr.bf16.mxu0 %v511
    %625 = vmatpush1.bf16.msra.mxu0 %v510
    %626 = vmatprep.subr.bf16.mxu0 %v515
    %627 = vmatpush1.bf16.msra.mxu0 %v514
    %628 = vmatprep.subr.bf16.mxu0 %v519
    %629 = vmatpush1.bf16.msra.mxu0 %v518
    %630 = vmatprep.subr.bf16.mxu0 %v523
    %631 = vmatpush1.bf16.msra.mxu0 %v522
    %632 = vmatprep.subr.bf16.mxu0 %v527
    %633 = vmatpush1.bf16.msra.mxu0 %v526
    %634 = vmatprep.subr.bf16.mxu0 %v531
    %635 = vmatpush1.bf16.msra.mxu0 %v530
    %636 = vmatprep.subr.bf16.mxu0 %v535
    %637 = vmatpush1.bf16.msra.mxu0 %v534
    %638 = vmatprep.subr.bf16.mxu0 %v539
    %639 = vmatpush1.bf16.msra.mxu0 %v538
    %640 = vmatprep.subr.bf16.mxu0 %v543
    %641 = vmatpush1.bf16.msra.mxu0 %v542
    %642 = vmatprep.mubr.bf16.mxu0 %v186
    %643 = vmatmul.mubr.bf16.gmra.mrb[0].mxu0 %v185
    %v644 = vpop.f32.mrb[0].mxu0
    %v645 = vadd.f32 %v277, %v644
    %v646 = vpop.f32.mrb[0].mxu0
    %v647 = vadd.f32 %v281, %v646
    %v648 = vpop.f32.mrb[0].mxu0
    %v649 = vpop.f32.mrb[0].mxu0
    %650 = vdwg.mxu0
    %651 = vmatprep.subr.bf16.mxu0 %v485
    %652 = vmatpush1.bf16.msra.mxu0 %v484
    %653 = vmatprep.subr.bf16.mxu0 %v489
    %654 = vmatpush1.bf16.msra.mxu0 %v488
    %655 = vmatprep.subr.bf16.mxu0 %v493
    %656 = vmatpush1.bf16.msra.mxu0 %v492
    %657 = vmatprep.subr.bf16.mxu0 %v497
    %658 = vmatpush1.bf16.msra.mxu0 %v496
    %659 = vmatprep.subr.bf16.mxu0 %v501
    %660 = vmatpush1.bf16.msra.mxu0 %v500
    %661 = vmatprep.subr.bf16.mxu0 %v505
    %662 = vmatpush1.bf16.msra.mxu0 %v504
    %663 = vmatprep.subr.bf16.mxu0 %v509
    %664 = vmatpush1.bf16.msra.mxu0 %v508
    %665 = vmatprep.subr.bf16.mxu0 %v513
    %666 = vmatpush1.bf16.msra.mxu0 %v512
    %667 = vmatprep.subr.bf16.mxu0 %v517
    %668 = vmatpush1.bf16.msra.mxu0 %v516
    %669 = vmatprep.subr.bf16.mxu0 %v521
    %670 = vmatpush1.bf16.msra.mxu0 %v520
    %671 = vmatprep.subr.bf16.mxu0 %v525
    %672 = vmatpush1.bf16.msra.mxu0 %v524
    %673 = vmatprep.subr.bf16.mxu0 %v529
    %674 = vmatpush1.bf16.msra.mxu0 %v528
    %675 = vmatprep.subr.bf16.mxu0 %v533
    %676 = vmatpush1.bf16.msra.mxu0 %v532
    %677 = vmatprep.subr.bf16.mxu0 %v537
    %678 = vmatpush1.bf16.msra.mxu0 %v536
    %679 = vmatprep.subr.bf16.mxu0 %v541
    %680 = vmatpush1.bf16.msra.mxu0 %v540
    %681 = vmatprep.subr.bf16.mxu0 %v545
    %682 = vmatpush1.bf16.msra.mxu0 %v544
    %683 = vmatprep.mubr.bf16.mxu0 %v186
    %684 = vmatmul.mubr.bf16.gmra.mrb[0].mxu0 %v185
    %v685 = vpop.f32.mrb[0].mxu0
    %v686 = vadd.f32 %v285, %v685
    %v687 = vpop.f32.mrb[0].mxu0
    %v688 = vadd.f32 %v289, %v687
    %v689 = vpop.f32.mrb[0].mxu0
    %v690 = vpop.f32.mrb[0].mxu0
    %691 = vdwg.mxu0
    %v692 = vmax.f32 %v645, 0.0
    %v693 = vmax.f32 %v647, 0.0
    %v694 = vmax.f32 %v686, 0.0
    %v695 = vmax.f32 %v688, 0.0
    %v696 = vpack.c.bf16 %v692, %v692
    %v697 = vpack.c.bf16 %v693, %v693
    %v698 = vpack.c.bf16 %v694, %v694
    %v699 = vpack.c.bf16 %v695, %v695
    %v700 = vld [vmem:[#allocation4] sm:$0xff]
    %v701 = vld [vmem:[#allocation4 + $0x8] sm:$0xff]
    %v702 = vld [vmem:[#allocation4 + $0x10] sm:$0xff]
    %v703 = vld [vmem:[#allocation4 + $0x18] sm:$0xff]
    %v704 = vld [vmem:[#allocation4 + $0x20] sm:$0xff]
    %v705 = vld [vmem:[#allocation4 + $0x28] sm:$0xff]
    %v706 = vld [vmem:[#allocation4 + $0x30] sm:$0xff]
    %v707 = vld [vmem:[#allocation4 + $0x38] sm:$0xff]
    %v708 = vld [vmem:[#allocation4 + $0x40] sm:$0xff]
    %v709 = vld [vmem:[#allocation4 + $0x48] sm:$0xff]
    %v710 = vld [vmem:[#allocation4 + $0x50] sm:$0xff]
    %v711 = vld [vmem:[#allocation4 + $0x58] sm:$0xff]
    %v712 = vld [vmem:[#allocation4 + $0x60] sm:$0xff]
    %v713 = vld [vmem:[#allocation4 + $0x68] sm:$0xff]
    %v714 = vld [vmem:[#allocation4 + $0x70] sm:$0xff]
    %v715 = vld [vmem:[#allocation4 + $0x78] sm:$0xff]
    %v716 = vld [vmem:[#allocation4 + $0x80] sm:$0xff]
    %v717 = vld [vmem:[#allocation4 + $0x88] sm:$0xff]
    %v718 = vld [vmem:[#allocation4 + $0x90] sm:$0xff]
    %v719 = vld [vmem:[#allocation4 + $0x98] sm:$0xff]
    %v720 = vld [vmem:[#allocation4 + $0xa0] sm:$0xff]
    %v721 = vld [vmem:[#allocation4 + $0xa8] sm:$0xff]
    %v722 = vld [vmem:[#allocation4 + $0xb0] sm:$0xff]
    %v723 = vld [vmem:[#allocation4 + $0xb8] sm:$0xff]
    %v724 = vld [vmem:[#allocation4 + $0xc0] sm:$0xff]
    %v725 = vld [vmem:[#allocation4 + $0xc8] sm:$0xff]
    %v726 = vld [vmem:[#allocation4 + $0xd0] sm:$0xff]
    %v727 = vld [vmem:[#allocation4 + $0xd8] sm:$0xff]
    %v728 = vld [vmem:[#allocation4 + $0xe0] sm:$0xff]
    %v729 = vld [vmem:[#allocation4 + $0xe8] sm:$0xff]
    %v730 = vld [vmem:[#allocation4 + $0xf0] sm:$0xff]
    %v731 = vld [vmem:[#allocation4 + $0xf8] sm:$0xff]
    %v732 = vld [vmem:[#allocation4 + $0x100] sm:$0xff]
    %v733 = vld [vmem:[#allocation4 + $0x108] sm:$0xff]
    %v734 = vld [vmem:[#allocation4 + $0x110] sm:$0xff]
    %v735 = vld [vmem:[#allocation4 + $0x118] sm:$0xff]
    %v736 = vld [vmem:[#allocation4 + $0x120] sm:$0xff]
    %v737 = vld [vmem:[#allocation4 + $0x128] sm:$0xff]
    %v738 = vld [vmem:[#allocation4 + $0x130] sm:$0xff]
    %v739 = vld [vmem:[#allocation4 + $0x138] sm:$0xff]
    %v740 = vld [vmem:[#allocation4 + $0x140] sm:$0xff]
    %v741 = vld [vmem:[#allocation4 + $0x148] sm:$0xff]
    %v742 = vld [vmem:[#allocation4 + $0x150] sm:$0xff]
    %v743 = vld [vmem:[#allocation4 + $0x158] sm:$0xff]
    %v744 = vld [vmem:[#allocation4 + $0x160] sm:$0xff]
    %v745 = vld [vmem:[#allocation4 + $0x168] sm:$0xff]
    %v746 = vld [vmem:[#allocation4 + $0x170] sm:$0xff]
    %v747 = vld [vmem:[#allocation4 + $0x178] sm:$0xff]
    %v748 = vld [vmem:[#allocation4 + $0x180] sm:$0xff]
    %v749 = vld [vmem:[#allocation4 + $0x188] sm:$0xff]
    %v750 = vld [vmem:[#allocation4 + $0x190] sm:$0xff]
    %v751 = vld [vmem:[#allocation4 + $0x198] sm:$0xff]
    %v752 = vld [vmem:[#allocation4 + $0x1a0] sm:$0xff]
    %v753 = vld [vmem:[#allocation4 + $0x1a8] sm:$0xff]
    %v754 = vld [vmem:[#allocation4 + $0x1b0] sm:$0xff]
    %v755 = vld [vmem:[#allocation4 + $0x1b8] sm:$0xff]
    %v756 = vld [vmem:[#allocation4 + $0x1c0] sm:$0xff]
    %v757 = vld [vmem:[#allocation4 + $0x1c8] sm:$0xff]
    %v758 = vld [vmem:[#allocation4 + $0x1d0] sm:$0xff]
    %v759 = vld [vmem:[#allocation4 + $0x1d8] sm:$0xff]
    %v760 = vld [vmem:[#allocation4 + $0x1e0] sm:$0xff]
    %v761 = vld [vmem:[#allocation4 + $0x1e8] sm:$0xff]
    %v762 = vld [vmem:[#allocation4 + $0x1f0] sm:$0xff]
    %v763 = vld [vmem:[#allocation4 + $0x1f8] sm:$0xff]
    %v764 = vld [vmem:[%s6] sm:$0x3]
    %v765 = vunpack.c.l.bf16 %v764
    %v767 = vlaneseq
    %v768 = vshrl.u32 %v767, 7
    %v769 = vsub.s32 0, %v768
    %v770 = vrot.slane %v765, %v769
    %v771 = vlaneseq
    %v772 = vshrl.u32 %v771, 7
    %v773 = vsub.s32 2, %v772
    %v774 = vrot.slane %v765, %v773
    %v777 = vlaneseq
    %v778 = vshrl.u32 %v777, 7
    %v779 = vsub.s32 0, %v778
    %v780 = vrot.slane %v770, %v779
    %v781 = vlaneseq
    %v782 = vshrl.u32 %v781, 7
    %v783 = vsub.s32 0, %v782
    %v784 = vrot.slane %v774, %v783
    %v849 = vunpack.c.l.b16 %v700
    %v850 = vunpack.c.h.b16 %v700
    %v851 = vunpack.c.l.b16 %v701
    %v852 = vunpack.c.h.b16 %v701
    %v853 = vunpack.c.l.b16 %v702
    %v854 = vunpack.c.h.b16 %v702
    %v855 = vunpack.c.l.b16 %v703
    %v856 = vunpack.c.h.b16 %v703
    %v857 = vunpack.c.l.b16 %v704
    %v858 = vunpack.c.h.b16 %v704
    %v859 = vunpack.c.l.b16 %v705
    %v860 = vunpack.c.h.b16 %v705
    %v861 = vunpack.c.l.b16 %v706
    %v862 = vunpack.c.h.b16 %v706
    %v863 = vunpack.c.l.b16 %v707
    %v864 = vunpack.c.h.b16 %v707
    %v865 = vunpack.c.l.b16 %v708
    %v866 = vunpack.c.h.b16 %v708
    %v867 = vunpack.c.l.b16 %v709
    %v868 = vunpack.c.h.b16 %v709
    %v869 = vunpack.c.l.b16 %v710
    %v870 = vunpack.c.h.b16 %v710
    %v871 = vunpack.c.l.b16 %v711
    %v872 = vunpack.c.h.b16 %v711
    %v873 = vunpack.c.l.b16 %v712
    %v874 = vunpack.c.h.b16 %v712
    %v875 = vunpack.c.l.b16 %v713
    %v876 = vunpack.c.h.b16 %v713
    %v877 = vunpack.c.l.b16 %v714
    %v878 = vunpack.c.h.b16 %v714
    %v879 = vunpack.c.l.b16 %v715
    %v880 = vunpack.c.h.b16 %v715
    %v881 = vunpack.c.l.b16 %v716
    %v882 = vunpack.c.h.b16 %v716
    %v883 = vunpack.c.l.b16 %v717
    %v884 = vunpack.c.h.b16 %v717
    %v885 = vunpack.c.l.b16 %v718
    %v886 = vunpack.c.h.b16 %v718
    %v887 = vunpack.c.l.b16 %v719
    %v888 = vunpack.c.h.b16 %v719
    %v889 = vunpack.c.l.b16 %v720
    %v890 = vunpack.c.h.b16 %v720
    %v891 = vunpack.c.l.b16 %v721
    %v892 = vunpack.c.h.b16 %v721
    %v893 = vunpack.c.l.b16 %v722
    %v894 = vunpack.c.h.b16 %v722
    %v895 = vunpack.c.l.b16 %v723
    %v896 = vunpack.c.h.b16 %v723
    %v897 = vunpack.c.l.b16 %v724
    %v898 = vunpack.c.h.b16 %v724
    %v899 = vunpack.c.l.b16 %v725
    %v900 = vunpack.c.h.b16 %v725
    %v901 = vunpack.c.l.b16 %v726
    %v902 = vunpack.c.h.b16 %v726
    %v903 = vunpack.c.l.b16 %v727
    %v904 = vunpack.c.h.b16 %v727
    %v905 = vunpack.c.l.b16 %v728
    %v906 = vunpack.c.h.b16 %v728
    %v907 = vunpack.c.l.b16 %v729
    %v908 = vunpack.c.h.b16 %v729
    %v909 = vunpack.c.l.b16 %v730
    %v910 = vunpack.c.h.b16 %v730
    %v911 = vunpack.c.l.b16 %v731
    %v912 = vunpack.c.h.b16 %v731
    %v913 = vunpack.c.l.b16 %v732
    %v914 = vunpack.c.h.b16 %v732
    %v915 = vunpack.c.l.b16 %v733
    %v916 = vunpack.c.h.b16 %v733
    %v917 = vunpack.c.l.b16 %v734
    %v918 = vunpack.c.h.b16 %v734
    %v919 = vunpack.c.l.b16 %v735
    %v920 = vunpack.c.h.b16 %v735
    %v921 = vunpack.c.l.b16 %v736
    %v922 = vunpack.c.h.b16 %v736
    %v923 = vunpack.c.l.b16 %v737
    %v924 = vunpack.c.h.b16 %v737
    %v925 = vunpack.c.l.b16 %v738
    %v926 = vunpack.c.h.b16 %v738
    %v927 = vunpack.c.l.b16 %v739
    %v928 = vunpack.c.h.b16 %v739
    %v929 = vunpack.c.l.b16 %v740
    %v930 = vunpack.c.h.b16 %v740
    %v931 = vunpack.c.l.b16 %v741
    %v932 = vunpack.c.h.b16 %v741
    %v933 = vunpack.c.l.b16 %v742
    %v934 = vunpack.c.h.b16 %v742
    %v935 = vunpack.c.l.b16 %v743
    %v936 = vunpack.c.h.b16 %v743
    %v937 = vunpack.c.l.b16 %v744
    %v938 = vunpack.c.h.b16 %v744
    %v939 = vunpack.c.l.b16 %v745
    %v940 = vunpack.c.h.b16 %v745
    %v941 = vunpack.c.l.b16 %v746
    %v942 = vunpack.c.h.b16 %v746
    %v943 = vunpack.c.l.b16 %v747
    %v944 = vunpack.c.h.b16 %v747
    %v945 = vunpack.c.l.b16 %v748
    %v946 = vunpack.c.h.b16 %v748
    %v947 = vunpack.c.l.b16 %v749
    %v948 = vunpack.c.h.b16 %v749
    %v949 = vunpack.c.l.b16 %v750
    %v950 = vunpack.c.h.b16 %v750
    %v951 = vunpack.c.l.b16 %v751
    %v952 = vunpack.c.h.b16 %v751
    %v953 = vunpack.c.l.b16 %v752
    %v954 = vunpack.c.h.b16 %v752
    %v955 = vunpack.c.l.b16 %v753
    %v956 = vunpack.c.h.b16 %v753
    %v957 = vunpack.c.l.b16 %v754
    %v958 = vunpack.c.h.b16 %v754
    %v959 = vunpack.c.l.b16 %v755
    %v960 = vunpack.c.h.b16 %v755
    %v961 = vunpack.c.l.b16 %v756
    %v962 = vunpack.c.h.b16 %v756
    %v963 = vunpack.c.l.b16 %v757
    %v964 = vunpack.c.h.b16 %v757
    %v965 = vunpack.c.l.b16 %v758
    %v966 = vunpack.c.h.b16 %v758
    %v967 = vunpack.c.l.b16 %v759
    %v968 = vunpack.c.h.b16 %v759
    %v969 = vunpack.c.l.b16 %v760
    %v970 = vunpack.c.h.b16 %v760
    %v971 = vunpack.c.l.b16 %v761
    %v972 = vunpack.c.h.b16 %v761
    %v973 = vunpack.c.l.b16 %v762
    %v974 = vunpack.c.h.b16 %v762
    %v975 = vunpack.c.l.b16 %v763
    %v976 = vunpack.c.h.b16 %v763
    %v977 = vpack.c.b16 %v851, %v849
    %v978 = vpack.c.b16 %v852, %v850
    %v979 = vpack.c.b16 %v855, %v853
    %v980 = vpack.c.b16 %v856, %v854
    %v981 = vpack.c.b16 %v859, %v857
    %v982 = vpack.c.b16 %v860, %v858
    %v983 = vpack.c.b16 %v863, %v861
    %v984 = vpack.c.b16 %v864, %v862
    %v985 = vpack.c.b16 %v867, %v865
    %v986 = vpack.c.b16 %v868, %v866
    %v987 = vpack.c.b16 %v871, %v869
    %v988 = vpack.c.b16 %v872, %v870
    %v989 = vpack.c.b16 %v875, %v873
    %v990 = vpack.c.b16 %v876, %v874
    %v991 = vpack.c.b16 %v879, %v877
    %v992 = vpack.c.b16 %v880, %v878
    %v993 = vpack.c.b16 %v883, %v881
    %v994 = vpack.c.b16 %v884, %v882
    %v995 = vpack.c.b16 %v887, %v885
    %v996 = vpack.c.b16 %v888, %v886
    %v997 = vpack.c.b16 %v891, %v889
    %v998 = vpack.c.b16 %v892, %v890
    %v999 = vpack.c.b16 %v895, %v893
    %v1000 = vpack.c.b16 %v896, %v894
    %v1001 = vpack.c.b16 %v899, %v897
    %v1002 = vpack.c.b16 %v900, %v898
    %v1003 = vpack.c.b16 %v903, %v901
    %v1004 = vpack.c.b16 %v904, %v902
    %v1005 = vpack.c.b16 %v907, %v905
    %v1006 = vpack.c.b16 %v908, %v906
    %v1007 = vpack.c.b16 %v911, %v909
    %v1008 = vpack.c.b16 %v912, %v910
    %v1009 = vpack.c.b16 %v915, %v913
    %v1010 = vpack.c.b16 %v916, %v914
    %v1011 = vpack.c.b16 %v919, %v917
    %v1012 = vpack.c.b16 %v920, %v918
    %v1013 = vpack.c.b16 %v923, %v921
    %v1014 = vpack.c.b16 %v924, %v922
    %v1015 = vpack.c.b16 %v927, %v925
    %v1016 = vpack.c.b16 %v928, %v926
    %v1017 = vpack.c.b16 %v931, %v929
    %v1018 = vpack.c.b16 %v932, %v930
    %v1019 = vpack.c.b16 %v935, %v933
    %v1020 = vpack.c.b16 %v936, %v934
    %v1021 = vpack.c.b16 %v939, %v937
    %v1022 = vpack.c.b16 %v940, %v938
    %v1023 = vpack.c.b16 %v943, %v941
    %v1024 = vpack.c.b16 %v944, %v942
    %v1025 = vpack.c.b16 %v947, %v945
    %v1026 = vpack.c.b16 %v948, %v946
    %v1027 = vpack.c.b16 %v951, %v949
    %v1028 = vpack.c.b16 %v952, %v950
    %v1029 = vpack.c.b16 %v955, %v953
    %v1030 = vpack.c.b16 %v956, %v954
    %v1031 = vpack.c.b16 %v959, %v957
    %v1032 = vpack.c.b16 %v960, %v958
    %v1033 = vpack.c.b16 %v963, %v961
    %v1034 = vpack.c.b16 %v964, %v962
    %v1035 = vpack.c.b16 %v967, %v965
    %v1036 = vpack.c.b16 %v968, %v966
    %v1037 = vpack.c.b16 %v971, %v969
    %v1038 = vpack.c.b16 %v972, %v970
    %v1039 = vpack.c.b16 %v975, %v973
    %v1040 = vpack.c.b16 %v976, %v974
    %1105 = vmatprep.subr.bf16.mxu0 %v978
    %1106 = vmatpush1.bf16.msra.mxu0 %v977
    %1107 = vmatprep.subr.bf16.mxu0 %v980
    %1108 = vmatpush1.bf16.msra.mxu0 %v979
    %1109 = vmatprep.subr.bf16.mxu0 %v982
    %1110 = vmatpush1.bf16.msra.mxu0 %v981
    %1111 = vmatprep.subr.bf16.mxu0 %v984
    %1112 = vmatpush1.bf16.msra.mxu0 %v983
    %1113 = vmatprep.subr.bf16.mxu0 %v986
    %1114 = vmatpush1.bf16.msra.mxu0 %v985
    %1115 = vmatprep.subr.bf16.mxu0 %v988
    %1116 = vmatpush1.bf16.msra.mxu0 %v987
    %1117 = vmatprep.subr.bf16.mxu0 %v990
    %1118 = vmatpush1.bf16.msra.mxu0 %v989
    %1119 = vmatprep.subr.bf16.mxu0 %v992
    %1120 = vmatpush1.bf16.msra.mxu0 %v991
    %1121 = vmatprep.subr.bf16.mxu0 %v994
    %1122 = vmatpush1.bf16.msra.mxu0 %v993
    %1123 = vmatprep.subr.bf16.mxu0 %v996
    %1124 = vmatpush1.bf16.msra.mxu0 %v995
    %1125 = vmatprep.subr.bf16.mxu0 %v998
    %1126 = vmatpush1.bf16.msra.mxu0 %v997
    %1127 = vmatprep.subr.bf16.mxu0 %v1000
    %1128 = vmatpush1.bf16.msra.mxu0 %v999
    %1129 = vmatprep.subr.bf16.mxu0 %v1002
    %1130 = vmatpush1.bf16.msra.mxu0 %v1001
    %1131 = vmatprep.subr.bf16.mxu0 %v1004
    %1132 = vmatpush1.bf16.msra.mxu0 %v1003
    %1133 = vmatprep.subr.bf16.mxu0 %v1006
    %1134 = vmatpush1.bf16.msra.mxu0 %v1005
    %1135 = vmatprep.subr.bf16.mxu0 %v1008
    %1136 = vmatpush1.bf16.msra.mxu0 %v1007
    %1137 = vmatprep.mubr.bf16.mxu0 %v697
    %1138 = vmatmul.mubr.bf16.gmra.mrb[0].mxu0 %v696
    %v1139 = vpop.f32.mrb[0].mxu0
    %v1140 = vadd.f32 %v780, %v1139
    %v1141 = vpop.f32.mrb[0].mxu0
    %v1142 = vadd.f32 %v784, %v1141
    %v1143 = vpop.f32.mrb[0].mxu0
    %v1144 = vpop.f32.mrb[0].mxu0
    %1145 = vdwg.mxu0
    %1146 = vmatprep.subr.bf16.mxu0 %v1010
    %1147 = vmatpush1.bf16.msra.mxu0 %v1009
    %1148 = vmatprep.subr.bf16.mxu0 %v1012
    %1149 = vmatpush1.bf16.msra.mxu0 %v1011
    %1150 = vmatprep.subr.bf16.mxu0 %v1014
    %1151 = vmatpush1.bf16.msra.mxu0 %v1013
    %1152 = vmatprep.subr.bf16.mxu0 %v1016
    %1153 = vmatpush1.bf16.msra.mxu0 %v1015
    %1154 = vmatprep.subr.bf16.mxu0 %v1018
    %1155 = vmatpush1.bf16.msra.mxu0 %v1017
    %1156 = vmatprep.subr.bf16.mxu0 %v1020
    %1157 = vmatpush1.bf16.msra.mxu0 %v1019
    %1158 = vmatprep.subr.bf16.mxu0 %v1022
    %1159 = vmatpush1.bf16.msra.mxu0 %v1021
    %1160 = vmatprep.subr.bf16.mxu0 %v1024
    %1161 = vmatpush1.bf16.msra.mxu0 %v1023
    %1162 = vmatprep.subr.bf16.mxu0 %v1026
    %1163 = vmatpush1.bf16.msra.mxu0 %v1025
    %1164 = vmatprep.subr.bf16.mxu0 %v1028
    %1165 = vmatpush1.bf16.msra.mxu0 %v1027
    %1166 = vmatprep.subr.bf16.mxu0 %v1030
    %1167 = vmatpush1.bf16.msra.mxu0 %v1029
    %1168 = vmatprep.subr.bf16.mxu0 %v1032
    %1169 = vmatpush1.bf16.msra.mxu0 %v1031
    %1170 = vmatprep.subr.bf16.mxu0 %v1034
    %1171 = vmatpush1.bf16.msra.mxu0 %v1033
    %1172 = vmatprep.subr.bf16.mxu0 %v1036
    %1173 = vmatpush1.bf16.msra.mxu0 %v1035
    %1174 = vmatprep.subr.bf16.mxu0 %v1038
    %1175 = vmatpush1.bf16.msra.mxu0 %v1037
    %1176 = vmatprep.subr.bf16.mxu0 %v1040
    %1177 = vmatpush1.bf16.msra.mxu0 %v1039
    %1178 = vmatprep.mubr.bf16.mxu0 %v699
    %1179 = vmatmul.mubr.bf16.gmra.mrb[0].mxu0 %v698
    %v1180 = vpop.f32.mrb[0].mxu0
    %v1181 = vadd.f32 %v1140, %v1180
    %v1182 = vpop.f32.mrb[0].mxu0
    %v1183 = vadd.f32 %v1142, %v1182
    %v1184 = vpop.f32.mrb[0].mxu0
    %v1185 = vpop.f32.mrb[0].mxu0
    %1186 = vdwg.mxu0
    %v1187 = vmax.f32 %v1181, 0.0
    %v1188 = vmax.f32 %v1183, 0.0
    %v1189 = vpack.c.bf16 %v1187, %v1187
    %v1190 = vpack.c.bf16 %v1188, %v1188
    %v1191 = vld [vmem:[%s7] sm:$0xf]
    %v1192 = vld [vmem:[%s7 + $0x4] sm:$0xf]
    %v1193 = vld [vmem:[%s7 + $0x8] sm:$0xf]
    %v1194 = vld [vmem:[%s7 + $0xc] sm:$0xf]
    %v1195 = vld [vmem:[%s7 + $0x10] sm:$0xf]
    %v1196 = vld [vmem:[%s7 + $0x14] sm:$0xf]
    %v1197 = vld [vmem:[%s7 + $0x18] sm:$0xf]
    %v1198 = vld [vmem:[%s7 + $0x1c] sm:$0xf]
    %v1199 = vld [vmem:[%s7 + $0x20] sm:$0xf]
    %v1200 = vld [vmem:[%s7 + $0x24] sm:$0xf]
    %v1201 = vld [vmem:[%s7 + $0x28] sm:$0xf]
    %v1202 = vld [vmem:[%s7 + $0x2c] sm:$0xf]
    %v1203 = vld [vmem:[%s7 + $0x30] sm:$0xf]
    %v1204 = vld [vmem:[%s7 + $0x34] sm:$0xf]
    %v1205 = vld [vmem:[%s7 + $0x38] sm:$0xf]
    %v1206 = vld [vmem:[%s7 + $0x3c] sm:$0xf]
    %v1207 = vld [vmem:[%s7 + $0x40] sm:$0xf]
    %v1208 = vld [vmem:[%s7 + $0x44] sm:$0xf]
    %v1209 = vld [vmem:[%s7 + $0x48] sm:$0xf]
    %v1210 = vld [vmem:[%s7 + $0x4c] sm:$0xf]
    %v1211 = vld [vmem:[%s7 + $0x50] sm:$0xf]
    %v1212 = vld [vmem:[%s7 + $0x54] sm:$0xf]
    %v1213 = vld [vmem:[%s7 + $0x58] sm:$0xf]
    %v1214 = vld [vmem:[%s7 + $0x5c] sm:$0xf]
    %v1215 = vld [vmem:[%s7 + $0x60] sm:$0xf]
    %v1216 = vld [vmem:[%s7 + $0x64] sm:$0xf]
    %v1217 = vld [vmem:[%s7 + $0x68] sm:$0xf]
    %v1218 = vld [vmem:[%s7 + $0x6c] sm:$0xf]
    %v1219 = vld [vmem:[%s7 + $0x70] sm:$0xf]
    %v1220 = vld [vmem:[%s7 + $0x74] sm:$0xf]
    %v1221 = vld [vmem:[%s7 + $0x78] sm:$0xf]
    %v1222 = vld [vmem:[%s7 + $0x7c] sm:$0xf]
    %v1223 = vld [vmem:[%s8] sm:$0x1]
    %v1224 = vunpack.c.l.bf16 %v1223
    %v1225 = vlaneseq
    %v1226 = vshrl.u32 %v1225, 7
    %v1227 = vsub.s32 0, %v1226
    %v1228 = vrot.slane %v1224, %v1227
    %v1261 = vunpack.c.l.b16 %v1191
    %v1262 = vunpack.c.l.b16 %v1192
    %v1263 = vunpack.c.l.b16 %v1193
    %v1264 = vunpack.c.l.b16 %v1194
    %v1265 = vunpack.c.l.b16 %v1195
    %v1266 = vunpack.c.l.b16 %v1196
    %v1267 = vunpack.c.l.b16 %v1197
    %v1268 = vunpack.c.l.b16 %v1198
    %v1269 = vunpack.c.l.b16 %v1199
    %v1270 = vunpack.c.l.b16 %v1200
    %v1271 = vunpack.c.l.b16 %v1201
    %v1272 = vunpack.c.l.b16 %v1202
    %v1273 = vunpack.c.l.b16 %v1203
    %v1274 = vunpack.c.l.b16 %v1204
    %v1275 = vunpack.c.l.b16 %v1205
    %v1276 = vunpack.c.l.b16 %v1206
    %v1277 = vunpack.c.l.b16 %v1207
    %v1278 = vunpack.c.l.b16 %v1208
    %v1279 = vunpack.c.l.b16 %v1209
    %v1280 = vunpack.c.l.b16 %v1210
    %v1281 = vunpack.c.l.b16 %v1211
    %v1282 = vunpack.c.l.b16 %v1212
    %v1283 = vunpack.c.l.b16 %v1213
    %v1284 = vunpack.c.l.b16 %v1214
    %v1285 = vunpack.c.l.b16 %v1215
    %v1286 = vunpack.c.l.b16 %v1216
    %v1287 = vunpack.c.l.b16 %v1217
    %v1288 = vunpack.c.l.b16 %v1218
    %v1289 = vunpack.c.l.b16 %v1219
    %v1290 = vunpack.c.l.b16 %v1220
    %v1291 = vunpack.c.l.b16 %v1221
    %v1292 = vunpack.c.l.b16 %v1222
    %v1293 = vpack.c.b16 %v1262, %v1261
    %v1294 = vpack.c.b16 %v1264, %v1263
    %v1295 = vpack.c.b16 %v1266, %v1265
    %v1296 = vpack.c.b16 %v1268, %v1267
    %v1297 = vpack.c.b16 %v1270, %v1269
    %v1298 = vpack.c.b16 %v1272, %v1271
    %v1299 = vpack.c.b16 %v1274, %v1273
    %v1300 = vpack.c.b16 %v1276, %v1275
    %v1301 = vpack.c.b16 %v1278, %v1277
    %v1302 = vpack.c.b16 %v1280, %v1279
    %v1303 = vpack.c.b16 %v1282, %v1281
    %v1304 = vpack.c.b16 %v1284, %v1283
    %v1305 = vpack.c.b16 %v1286, %v1285
    %v1306 = vpack.c.b16 %v1288, %v1287
    %v1307 = vpack.c.b16 %v1290, %v1289
    %v1308 = vpack.c.b16 %v1292, %v1291
    %1325 = vmatprep.subr.bf16.mxu0 0
    %1326 = vmatpush1.bf16.msra.mxu0 %v1293
    %1327 = vmatprep.subr.bf16.mxu0 0
    %1328 = vmatpush1.bf16.msra.mxu0 %v1294
    %1329 = vmatprep.subr.bf16.mxu0 0
    %1330 = vmatpush1.bf16.msra.mxu0 %v1295
    %1331 = vmatprep.subr.bf16.mxu0 0
    %1332 = vmatpush1.bf16.msra.mxu0 %v1296
    %1333 = vmatprep.subr.bf16.mxu0 0
    %1334 = vmatpush1.bf16.msra.mxu0 %v1297
    %1335 = vmatprep.subr.bf16.mxu0 0
    %1336 = vmatpush1.bf16.msra.mxu0 %v1298
    %1337 = vmatprep.subr.bf16.mxu0 0
    %1338 = vmatpush1.bf16.msra.mxu0 %v1299
    %1339 = vmatprep.subr.bf16.mxu0 0
    %1340 = vmatpush1.bf16.msra.mxu0 %v1300
    %1341 = vmatprep.subr.bf16.mxu0 0
    %1342 = vmatpush1.bf16.msra.mxu0 %v1301
    %1343 = vmatprep.subr.bf16.mxu0 0
    %1344 = vmatpush1.bf16.msra.mxu0 %v1302
    %1345 = vmatprep.subr.bf16.mxu0 0
    %1346 = vmatpush1.bf16.msra.mxu0 %v1303
    %1347 = vmatprep.subr.bf16.mxu0 0
    %1348 = vmatpush1.bf16.msra.mxu0 %v1304
    %1349 = vmatprep.subr.bf16.mxu0 0
    %1350 = vmatpush1.bf16.msra.mxu0 %v1305
    %1351 = vmatprep.subr.bf16.mxu0 0
    %1352 = vmatpush1.bf16.msra.mxu0 %v1306
    %1353 = vmatprep.subr.bf16.mxu0 0
    %1354 = vmatpush1.bf16.msra.mxu0 %v1307
    %1355 = vmatprep.subr.bf16.mxu0 0
    %1356 = vmatpush1.bf16.msra.mxu0 %v1308
    %1357 = vmatprep.mubr.bf16.mxu0 %v1190
    %1358 = vmatmul.mubr.bf16.gmra.mrb[0].mxu0 %v1189
    %v1359 = vpop.f32.mrb[0].mxu0
    %v1360 = vadd.f32 %v1228, %v1359
    %v1361 = vpop.f32.mrb[0].mxu0
    %v1362 = vpop.f32.mrb[0].mxu0
    %v1363 = vpop.f32.mrb[0].mxu0
    %1364 = vdwg.mxu0
    %vm1365 = vcmp.gt.f32.partialorder %v1360, 20.0
    %v1366 = vmin.f32 %v1360, 20.0
    %v1367 = vmul.f32 %v1366, 1.442695
    %v1368 = vpow.pop %v1367
    %v1369 = vadd.f32 %v1368, 1.0
    %v1370 = vlog2.pop %v1369
    %v1371 = vmul.f32 %v1370, 0.6931472
    %v1372 = vmul.f32 -0.5, %v1368
    %v1373 = vadd.f32 %v1372, 1.0
    %v1374 = vmul.f32 %v1373, %v1368
    %v1375 = vand.u32 2147483647, %v1368
    %vm1376 = vcmp.lt.f32.partialorder %v1375, 0.0004427343
    %v1377 = vsel %vm1376, %v1374, %v1371
    %v1378 = vsel %vm1365, %v1360, %v1377
    %v1379 = vadd.f32 %v1378, 0.05
    %v1380 = vlaneseq
    %v1381 = vand.u32 %v1380, 127
    %vm1382 = vcmp.ge.s32.totalorder %v1381, 2
    %v1383 = vsel %vm1382, %v1379, %v1360
    %vm1384 = vcmask 31744
    %1385 = vst.msk [vmem:[%s9] sm:$0xff] %vm1384, %v1383
    // Predicated region
    $region46: #{tpu_custom_call.1} parent=1 // pred_check
      _
    $region47: #{tpu_custom_call.1} parent=1 // pred_check_branch
      %1387 = sbr.rel (0) target = $region49
    $region48: #{tpu_custom_call.1} parent=1 // pred_region
      _
    $region49: #{tpu_custom_call.1} parent=1 // pred_fallthru
      _
    // Predicated region
    $region50: #{tpu_custom_call.1} parent=1 // pred_check
      _
    $region51: #{tpu_custom_call.1} parent=1 // pred_check_branch
      %1389 = sbr.rel (0) target = $region53
    $region52: #{tpu_custom_call.1} parent=1 // pred_region
      _
    $region53: #{tpu_custom_call.1} parent=1 // pred_fallthru
      _
    %1390 = vsyncpa [#allocation3], 1
    %1391 = vsyncpa [#allocation5], 1

</llo_original>
